<compile_context>
chip_gen: v7x
topology: tpu7x:2x2x1
jax: 0.10.0
libtpu: 0.0.40
codegen_flags: <defaults>
</compile_context>

<pallas_src>
import functools
import math

import numpy as np
import jax
import jax.numpy as jnp
from jax.experimental import pallas as pl
from jax.experimental.pallas import tpu as pltpu

_VMEM_LIMIT = 32 * 1024 * 1024
_POISON = -1.0e9          # drives ring rows below 0 so ReLU zeroes them


def _gaussian_taps_5(sigma=1.0):
    xs = np.arange(5, dtype=np.float64) - 2.0
    k = np.exp(-xs ** 2 / (2.0 * sigma ** 2))
    return k / k.sum()


# ----------------------------------------------------------------------------
# Kernel 1: fused [5x5 Gaussian blur (zero pad 2) + 2x2 avg-pool stride 2].
# The composite is a separable 6-tap stride-2 stencil; it is applied as two
# small matmuls per channel (lowering-safe, single HBM read of x and single
# write of the pooled result).
# ----------------------------------------------------------------------------
def _blur_pool_kernel(x_ref, aw_ref, ah_ref, o_ref, *, C):
    for c in range(C):
        t = jnp.dot(x_ref[0, c], aw_ref[...],
                    preferred_element_type=jnp.float32)          # (H, Wo)
        o_ref[0, c] = jnp.dot(ah_ref[...], t,
                              preferred_element_type=jnp.float32)  # (Ho, Wo)


def blur_pool_nchw(x, taps):
    """blurred = conv2d(x, 5x5 gaussian, pad=2); return avg_pool2(blurred)."""
    N, C, H, W = x.shape
    Ho, Wo = H // 2, W // 2            # NOTE: assumes even H, W (toy sizes ok)
    k = np.asarray(taps, np.float64)
    kk = np.zeros(6, np.float64)       # kk[m] = 0.5*(k[m] + k[m-1])
    kk[0:5] += k
    kk[1:6] += k
    kk *= 0.5

    def stride2_matrix(n_in, n_out):
        A = np.zeros((n_in, n_out), np.float32)
        for o in range(n_out):
            for m in range(6):
                j = 2 * o + m - 2
                if 0 <= j < n_in:
                    A[j, o] += kk[m]
        return A

    Aw = jnp.asarray(stride2_matrix(W, Wo))        # (W, Wo)
    Ah = jnp.asarray(stride2_matrix(H, Ho).T)      # (Ho, H)

    return pl.pallas_call(
        functools.partial(_blur_pool_kernel, C=C),
        out_shape=jax.ShapeDtypeStruct((N, C, Ho, Wo), jnp.float32),
        grid=(N,),
        in_specs=[
            pl.BlockSpec((1, C, H, W), lambda n: (n, 0, 0, 0)),
            pl.BlockSpec((W, Wo), lambda n: (0, 0)),
            pl.BlockSpec((Ho, H), lambda n: (0, 0)),
        ],
        out_specs=pl.BlockSpec((1, C, Ho, Wo), lambda n: (n, 0, 0, 0)),
        compiler_params=pltpu.CompilerParams(
            dimension_semantics=("parallel",),
            vmem_limit_bytes=_VMEM_LIMIT),
        cost_estimate=pl.CostEstimate(
            flops=int(N * C * (2 * H * W * Wo + 2 * Ho * H * Wo)),
            transcendentals=0,
            bytes_accessed=int(4 * N * C * (H * W + Ho * Wo)
                               + 4 * (W * Wo + Ho * H))),
    )(x, Aw, Ah)


# ----------------------------------------------------------------------------
# Kernel 2: fused [conv3x3 -> BN -> ReLU -> conv3x3 -> BN -> ReLU] per level.
#   conv1: one (Lt, K1p) x (K1p, 32) matmul on a trace-time im2col (with the
#          poison column encoding the conv2 zero-padding ring).
#   conv2: one (Lc, 288) x (288, 64) matmul on an in-VMEM shifted-slice im2col
#          of the h1 activation (never leaves VMEM).
# Grid = (batch, row_tiles); the 2-row halo is duplicated into the im2col at
# trace time so no overlapping BlockSpec windows are needed.
# ----------------------------------------------------------------------------
def _conv_stack_kernel(im_ref, w1_ref, b1_ref, w2_ref, b2_ref, o_ref, h1_ref,
                       *, Wp, W, TR, Lc):
    # conv1 (tap-packed matmul) + folded BN + ReLU.  Ring rows get -1e9 from
    # the poison column and come out as exactly 0.
    a1 = jnp.dot(im_ref[0, 0], w1_ref[...], preferred_element_type=jnp.float32)
    h1_ref[...] = jnp.maximum(a1 + b1_ref[...], 0.0).astype(h1_ref.dtype)

    # conv2: tap-stacked K = 9*32 = 288 matmul on the shifted-slice im2col.
    cols = [h1_ref[pl.ds(di * Wp + dj, Lc), :]
            for di in range(3) for dj in range(3)]
    patches = jnp.concatenate(cols, axis=-1)                     # (Lc, 288)
    a2 = jnp.dot(patches, w2_ref[...], preferred_element_type=jnp.float32)
    out = jnp.maximum(a2 + b2_ref[...], 0.0).astype(o_ref.dtype)

    # Compact store: drop the (Wp - W) wrap-junk columns of every output row
    # so the kernel emits exactly (TR*W, 64) valid pixels (no post-kernel glue).
    for r in range(TR):
        o_ref[0, 0, r * W:(r + 1) * W, :] = out[r * Wp:r * Wp + W, :]


def _pick_row_tile(H, Wp, max_flat=4096, max_rows=64):
    best = 1
    for tr in range(1, min(H, max_rows) + 1):
        if H % tr == 0 and (tr + 2) * Wp <= max_flat:
            best = tr
    return best


def conv_stack_level(x_nhwc, w1p, b1, w2p, b2):
    """Fused conv/BN/ReLU stack for one pyramid level.

    x_nhwc: (N, H, W, Cin) f32.  w1p: (K1p, 32) bf16 (tap-packed, BN folded,
    poison row), w2p: (288, 64) bf16 (tap-stacked, BN folded), b1/b2: folded
    shifts.  Returns (N, H*W, 64) bf16 (compact, row-major pixels).
    """
    N, H, W, Cin = x_nhwc.shape
    Wp = W + 2                      # h1 grid width (W + zero ring)
    K1p, c1 = w1p.shape
    K2, c2 = w2p.shape
    TR = _pick_row_tile(H, Wp)      # output rows per tile
    n_tiles = H // TR
    Lt = (TR + 2) * Wp              # flattened h1-grid rows per tile (w/ halo)
    Lc = (TR - 1) * Wp + W          # flattened conv2-output rows per tile

    # --- trace-time conv1 im2col over the extended (H+2, W+2) h1 grid -------
    xp2 = jnp.pad(x_nhwc, ((0, 0), (2, 2), (2, 2), (0, 0)))
    pats = [xp2[:, di:di + H + 2, dj:dj + W + 2, :]
            for di in range(3) for dj in range(3)]
    pat = jnp.concatenate(pats, axis=-1)               # (N, H+2, Wp, 9*Cin)
    # Poison column: 1.0 on the zero-padding ring, 0.0 inside.  Its weight row
    # is -1e9, so ReLU emits exactly 0 on the ring -- no mask input needed.
    gi = np.arange(H + 2)
    gj = np.arange(Wp)
    ring = ~(((gi >= 1) & (gi <= H))[:, None] & ((gj >= 1) & (gj <= W))[None, :])
    poison = jnp.broadcast_to(
        jnp.asarray(ring, jnp.float32)[None, :, :, None], (N, H + 2, Wp, 1))
    pieces = [pat, poison]
    pad_cols = K1p - 9 * Cin - 1
    if pad_cols > 0:
        pieces.append(jnp.zeros((N, H + 2, Wp, pad_cols), jnp.float32))
    pat = jnp.concatenate(pieces, axis=-1)             # (N, H+2, Wp, K1p)

    # Row tiles with the 1-row halo duplicated at trace time.
    if n_tiles == 1:
        tiles = pat[:, None]
    else:
        tiles = jnp.stack(
            [pat[:, k * TR:k * TR + TR + 2] for k in range(n_tiles)], axis=1)
    im2col = tiles.reshape(N, n_tiles, Lt, K1p).astype(jnp.bfloat16)

    flops = int(N * n_tiles * (2 * Lt * K1p * c1 + 2 * Lc * K2 * c2))
    bytes_accessed = int(2 * N * n_tiles * (Lt * K1p + TR * W * c2)
                         + 2 * (K1p * c1 + K2 * c2))

    out = pl.pallas_call(
        functools.partial(_conv_stack_kernel, Wp=Wp, W=W, TR=TR, Lc=Lc),
        out_shape=jax.ShapeDtypeStruct((N, n_tiles, TR * W, c2), jnp.bfloat16),
        grid=(N, n_tiles),
        in_specs=[
            pl.BlockSpec((1, 1, Lt, K1p), lambda n, k: (n, k, 0, 0)),
            pl.BlockSpec((K1p, c1), lambda n, k: (0, 0)),
            pl.BlockSpec((1, c1), lambda n, k: (0, 0)),
            pl.BlockSpec((K2, c2), lambda n, k: (0, 0)),
            pl.BlockSpec((1, c2), lambda n, k: (0, 0)),
        ],
        out_specs=pl.BlockSpec((1, 1, TR * W, c2), lambda n, k: (n, k, 0, 0)),
        scratch_shapes=[pltpu.VMEM((Lt, c1), jnp.bfloat16)],
        compiler_params=pltpu.CompilerParams(
            dimension_semantics=("parallel", "parallel"),
            vmem_limit_bytes=_VMEM_LIMIT),
        cost_estimate=pl.CostEstimate(flops=flops, transcendentals=0,
                                      bytes_accessed=bytes_accessed),
        # TODO(synk): add column tiling for very wide images (W*128 VMEM rows).
    )(im2col, w1p, b1, w2p, b2)

    return out.reshape(N, H * W, c2)


# ----------------------------------------------------------------------------
# Kernel 3: fused concat + 1x1 output conv, M-tiled with a parallel grid.
# y = sum_l x_l @ W_l + b  -- the 64*levels concat is never materialized.
# ----------------------------------------------------------------------------
def _fuse_1x1_kernel(*refs, n_levels):
    x_refs = refs[:n_levels]
    w_ref = refs[n_levels]
    b_ref = refs[n_levels + 1]
    o_ref = refs[n_levels + 2]
    acc = jnp.dot(x_refs[0][...], w_ref[0], preferred_element_type=jnp.float32)
    for l in range(1, n_levels):
        acc = acc + jnp.dot(x_refs[l][...], w_ref[l],
                            preferred_element_type=jnp.float32)
    o_ref[...] = (acc + b_ref[...]).astype(o_ref.dtype)


def _pick_tile_m(M):
    if M <= 256:
        return M
    for t in (2048, 1024, 512, 256):
        if M % t == 0 and M // t >= 2:
            return t
    return M


def fused_output_conv(features, w_levels, bias):
    n_levels = len(features)
    M, C = features[0].shape
    cout = w_levels.shape[-1]
    tile_m = _pick_tile_m(M)
    grid_m = pl.cdiv(M, tile_m)

    in_specs = [pl.BlockSpec((tile_m, C), lambda i: (i, 0))
                for _ in range(n_levels)]
    in_specs.append(pl.BlockSpec((n_levels, C, cout), lambda i: (0, 0, 0)))
    in_specs.append(pl.BlockSpec((1, cout), lambda i: (0, 0)))

    return pl.pallas_call(
        functools.partial(_fuse_1x1_kernel, n_levels=n_levels),
        out_shape=jax.ShapeDtypeStruct((M, cout), jnp.float32),
        grid=(grid_m,),
        in_specs=in_specs,
        out_specs=pl.BlockSpec((tile_m, cout), lambda i: (i, 0)),
        compiler_params=pltpu.CompilerParams(
            dimension_semantics=("parallel",),
            vmem_limit_bytes=_VMEM_LIMIT),
        cost_estimate=pl.CostEstimate(
            flops=int(2 * M * C * cout * n_levels), transcendentals=0,
            bytes_accessed=int(2 * M * C * n_levels + 4 * M * cout
                               + 2 * n_levels * C * cout)),
    )(*features, w_levels, bias)


# ----------------------------------------------------------------------------
# Bilinear upsample (align_corners=False, edge clamp) -- JAX data-movement glue
# on bf16 features.
# TODO(synk): fold the fixed 0.25/0.75-weight bilinear lerp into the fused 1x1
# output kernel to remove these full-resolution HBM round trips.
# ----------------------------------------------------------------------------
def bilinear_upsample(x_nhwc, factor):
    N, Hc, Wc, C = x_nhwc.shape
    Ho, Wo = Hc * factor, Wc * factor

    def coords(out_size, in_size):
        d = np.arange(out_size, dtype=np.float64)
        src = (d + 0.5) * (in_size / out_size) - 0.5
        src = np.clip(src, 0.0, in_size - 1)
        i0 = np.floor(src).astype(np.int32)
        i1 = np.minimum(i0 + 1, in_size - 1)
        f = (src - i0).astype(np.float32)
        return jnp.asarray(i0), jnp.asarray(i1), jnp.asarray(f)

    h0, h1, fh = coords(Ho, Hc)
    w0, w1, fw = coords(Wo, Wc)
    x = x_nhwc
    fh_ = fh[None, :, None, None]
    fw_ = fw[None, None, :, None]
    row = jnp.take(x, h0, axis=1) * (1.0 - fh_) + jnp.take(x, h1, axis=1) * fh_
    out = (jnp.take(row, w0, axis=2) * (1.0 - fw_)
           + jnp.take(row, w1, axis=2) * fw_)
    return out.astype(jnp.bfloat16)


# ----------------------------------------------------------------------------
# Deterministic parameter construction (Conv2d + folded eval-mode BatchNorm).
# ----------------------------------------------------------------------------
def _conv_bn_fold(key, kh, kw, cin, cout, eps=1e-5):
    kw_, kb, kg, kbt, km, kv = jax.random.split(key, 6)
    bound = 1.0 / math.sqrt(cin * kh * kw)
    w = jax.random.uniform(kw_, (kh, kw, cin, cout), jnp.float32, -bound, bound)
    b = jax.random.uniform(kb, (cout,), jnp.float32, -bound, bound)
    gamma = 1.0 + 0.1 * jax.random.normal(kg, (cout,), jnp.float32)
    beta = 0.1 * jax.random.normal(kbt, (cout,), jnp.float32)
    mean = 0.1 * jax.random.normal(km, (cout,), jnp.float32)
    var = jax.random.uniform(kv, (cout,), jnp.float32, 0.5, 1.5)
    s = gamma / jnp.sqrt(var + eps)
    scale = s
    shift = (b - mean) * s + beta
    return w, scale, shift


def init_params(key, input_channels=3, output_channels=64, pyramid_levels=3):
    params = {"levels": []}
    keys = jax.random.split(key, 2 * pyramid_levels + 2)
    for i in range(pyramid_levels):
        w1, s1, b1 = _conv_bn_fold(keys[2 * i], 3, 3, input_channels, 32)
        w2, s2, b2 = _conv_bn_fold(keys[2 * i + 1], 3, 3, 32, 64)
        params["levels"].append(dict(w1=w1, s1=s1, b1=b1, w2=w2, s2=s2, b2=b2))
    cin = 64 * pyramid_levels
    bound = 1.0 / math.sqrt(cin)
    params["out_w"] = jax.random.uniform(
        keys[-2], (1, 1, cin, output_channels), jnp.float32, -bound, bound)
    params["out_b"] = jax.random.uniform(
        keys[-1], (output_channels,), jnp.float32, -bound, bound)
    return params


def prepare_params(params):
    """Fold BN scale into the weights, tap-pack/tap-stack them, cast to bf16."""
    prepared = {"levels": []}
    for lvl in params["levels"]:
        cin = lvl["w1"].shape[2]
        c1 = lvl["w1"].shape[3]
        c2 = lvl["w2"].shape[3]
        K1p = ((9 * cin + 1 + 7) // 8) * 8          # 27 taps + poison -> 32
        w1f = (lvl["w1"] * lvl["s1"]).reshape(9 * cin, c1)
        rows = [w1f, jnp.full((1, c1), _POISON, jnp.float32)]
        pad_rows = K1p - 9 * cin - 1
        if pad_rows > 0:
            rows.append(jnp.zeros((pad_rows, c1), jnp.float32))
        w1p = jnp.concatenate(rows, axis=0)                     # (K1p, 32)
        w2f = (lvl["w2"] * lvl["s2"]).reshape(9 * c1, c2)       # (288, 64)
        prepared["levels"].append(dict(
            w1=w1p.astype(jnp.bfloat16),
            b1=lvl["b1"].reshape(1, c1).astype(jnp.float32),
            w2=w2f.astype(jnp.bfloat16),
            b2=lvl["b2"].reshape(1, c2).astype(jnp.float32)))
    n_levels = len(params["levels"])
    cin_out = params["out_w"].shape[2]
    cout = params["out_w"].shape[3]
    w_out = params["out_w"].reshape(cin_out, cout).reshape(
        n_levels, cin_out // n_levels, cout)
    prepared["out_w"] = w_out.astype(jnp.bfloat16)
    prepared["out_b"] = params["out_b"].reshape(1, cout).astype(jnp.float32)
    return prepared


# ----------------------------------------------------------------------------
# Forward pass (matches MultiScaleBranch.forward, eval mode)
# ----------------------------------------------------------------------------
def multi_scale_branch(x_nchw, params, pyramid_levels=3):
    x_nchw = x_nchw.astype(jnp.float32)
    N, C, H, W = x_nchw.shape
    taps = _gaussian_taps_5(sigma=1.0)

    # Gaussian pyramid: each level = fused (5x5 blur + 2x2 avg-pool) kernel.
    pyramid = [x_nchw]
    cur = x_nchw
    for _ in range(pyramid_levels - 1):
        cur = blur_pool_nchw(cur, taps)
        pyramid.append(cur)

    # Per-level fused conv/BN/ReLU stacks (compact (N, Hc*Wc, 64) bf16 output).
    feats = []
    for i, lvl in enumerate(pyramid):
        lvl_nhwc = jnp.transpose(lvl, (0, 2, 3, 1))
        p = params["levels"][i]
        feats.append(conv_stack_level(lvl_nhwc, p["w1"], p["b1"],
                                      p["w2"], p["b2"]))

    # Upsample coarse levels to full resolution (JAX glue) and fuse the
    # concat + 1x1 output conv into one tiled Pallas kernel.
    flat = [feats[0].reshape(N * H * W, -1)]
    for i in range(1, pyramid_levels):
        Hc, Wc = H >> i, W >> i
        up = bilinear_upsample(feats[i].reshape(N, Hc, Wc, -1), 2 ** i)
        flat.append(up.reshape(N * H * W, -1))

    y = fused_output_conv(flat, params["out_w"], params["out_b"])
    cout = params["out_w"].shape[-1]
    y = y.reshape(N, H, W, cout)
    return jnp.transpose(y, (0, 3, 1, 2))                    # NHWC -> NCHW


if __name__ == "__main__":
    key = jax.random.PRNGKey(0)
    kx, kp = jax.random.split(key)

    batch, in_ch, spatial = 2, 3, 16
    x = jax.random.normal(kx, (batch, in_ch, spatial, spatial), jnp.float32)

    raw_params = init_params(kp, input_channels=in_ch, output_channels=64,
                             pyramid_levels=3)
    params = prepare_params(raw_params)

    out = multi_scale_branch(x, params, pyramid_levels=3)
    out = jax.block_until_ready(out)
    assert out.shape == (batch, 64, spatial, spatial), out.shape
    assert bool(jnp.all(jnp.isfinite(out)))
    print("KERNEL_OK")
</pallas_src>

<mosaic_0001>
module attributes {stable_mosaic.version = 11 : i64} {
  func.func @_blur_pool_kernel(%arg0: i32, %arg1: memref<1x3x16x16xf32, #tpu.memory_space<vmem>>, %arg2: memref<16x8xf32, #tpu.memory_space<vmem>>, %arg3: memref<8x16xf32, #tpu.memory_space<vmem>>, %arg4: memref<1x3x8x8xf32, #tpu.memory_space<vmem>>) attributes {dimension_semantics = [#tpu.dimension_semantics<parallel>], iteration_bounds = array<i64: 2>, scalar_prefetch = 0 : i64, scratch_operands = 0 : i64, tpu.core_type = #tpu.core_type<tc>, window_params = [{transform_indices = @transform_0, window_bounds = array<i64: 1, 3, 16, 16>}, {pipeline_mode = #tpu.pipeline_mode<synchronous>, transform_indices = @transform_1, window_bounds = array<i64: 16, 8>}, {pipeline_mode = #tpu.pipeline_mode<synchronous>, transform_indices = @transform_2, window_bounds = array<i64: 8, 16>}, {transform_indices = @transform_3, window_bounds = array<i64: 1, 3, 8, 8>}]} {
    %c0 = arith.constant 0 : index
    %c0_0 = arith.constant 0 : index
    %c0_1 = arith.constant 0 : index
    %c0_2 = arith.constant 0 : index
    %0 = vector.load %arg1[%c0, %c0_0, %c0_1, %c0_2] : memref<1x3x16x16xf32, #tpu.memory_space<vmem>>, vector<1x1x16x16xf32>
    %1 = vector.shape_cast %0 : vector<1x1x16x16xf32> to vector<16x16xf32>
    %c0_3 = arith.constant 0 : index
    %c0_4 = arith.constant 0 : index
    %2 = vector.load %arg2[%c0_3, %c0_4] : memref<16x8xf32, #tpu.memory_space<vmem>>, vector<16x8xf32>
    %cst = arith.constant dense<0.000000e+00> : vector<16x8xf32>
    %3 = tpu.matmul %1, %2, %cst {dimension_numbers = #tpu.dot_dimension_numbers<[1], [0], [0], [1], [0, 0, 1, 1], [], []>} : vector<16x16xf32>, vector<16x8xf32>, vector<16x8xf32> -> vector<16x8xf32>
    %c0_5 = arith.constant 0 : index
    %c0_6 = arith.constant 0 : index
    %4 = vector.load %arg3[%c0_5, %c0_6] : memref<8x16xf32, #tpu.memory_space<vmem>>, vector<8x16xf32>
    %cst_7 = arith.constant dense<0.000000e+00> : vector<8x8xf32>
    %5 = tpu.matmul %4, %3, %cst_7 {dimension_numbers = #tpu.dot_dimension_numbers<[1], [0], [0], [1], [0, 0, 1, 1], [], []>} : vector<8x16xf32>, vector<16x8xf32>, vector<8x8xf32> -> vector<8x8xf32>
    %c0_8 = arith.constant 0 : index
    %c0_9 = arith.constant 0 : index
    %c0_10 = arith.constant 0 : index
    %c0_11 = arith.constant 0 : index
    %6 = vector.load %arg4[%c0_8, %c0_9, %c0_10, %c0_11] : memref<1x3x8x8xf32, #tpu.memory_space<vmem>>, vector<1x1x8x8xf32>
    %7 = vector.shape_cast %6 : vector<1x1x8x8xf32> to vector<8x8xf32>
    %8 = vector.shape_cast %5 : vector<8x8xf32> to vector<1x1x8x8xf32>
    tpu.vector_store %arg4[%c0_8, %c0_9, %c0_10, %c0_11], %8 {strides = array<i32>} : memref<1x3x8x8xf32, #tpu.memory_space<vmem>>, vector<1x1x8x8xf32>,
    %c0_12 = arith.constant 0 : index
    %c1 = arith.constant 1 : index
    %c0_13 = arith.constant 0 : index
    %c0_14 = arith.constant 0 : index
    %9 = vector.load %arg1[%c0_12, %c1, %c0_13, %c0_14] : memref<1x3x16x16xf32, #tpu.memory_space<vmem>>, vector<1x1x16x16xf32>
    %10 = vector.shape_cast %9 : vector<1x1x16x16xf32> to vector<16x16xf32>
    %c0_15 = arith.constant 0 : index
    %c0_16 = arith.constant 0 : index
    %11 = vector.load %arg2[%c0_15, %c0_16] : memref<16x8xf32, #tpu.memory_space<vmem>>, vector<16x8xf32>
    %cst_17 = arith.constant dense<0.000000e+00> : vector<16x8xf32>
    %12 = tpu.matmul %10, %11, %cst_17 {dimension_numbers = #tpu.dot_dimension_numbers<[1], [0], [0], [1], [0, 0, 1, 1], [], []>} : vector<16x16xf32>, vector<16x8xf32>, vector<16x8xf32> -> vector<16x8xf32>
    %c0_18 = arith.constant 0 : index
    %c0_19 = arith.constant 0 : index
    %13 = vector.load %arg3[%c0_18, %c0_19] : memref<8x16xf32, #tpu.memory_space<vmem>>, vector<8x16xf32>
    %cst_20 = arith.constant dense<0.000000e+00> : vector<8x8xf32>
    %14 = tpu.matmul %13, %12, %cst_20 {dimension_numbers = #tpu.dot_dimension_numbers<[1], [0], [0], [1], [0, 0, 1, 1], [], []>} : vector<8x16xf32>, vector<16x8xf32>, vector<8x8xf32> -> vector<8x8xf32>
    %c0_21 = arith.constant 0 : index
    %c1_22 = arith.constant 1 : index
    %c0_23 = arith.constant 0 : index
    %c0_24 = arith.constant 0 : index
    %15 = vector.load %arg4[%c0_21, %c1_22, %c0_23, %c0_24] : memref<1x3x8x8xf32, #tpu.memory_space<vmem>>, vector<1x1x8x8xf32>
    %16 = vector.shape_cast %15 : vector<1x1x8x8xf32> to vector<8x8xf32>
    %17 = vector.shape_cast %14 : vector<8x8xf32> to vector<1x1x8x8xf32>
    tpu.vector_store %arg4[%c0_21, %c1_22, %c0_23, %c0_24], %17 {strides = array<i32>} : memref<1x3x8x8xf32, #tpu.memory_space<vmem>>, vector<1x1x8x8xf32>,
    %c0_25 = arith.constant 0 : index
    %c2 = arith.constant 2 : index
    %c0_26 = arith.constant 0 : index
    %c0_27 = arith.constant 0 : index
    %18 = vector.load %arg1[%c0_25, %c2, %c0_26, %c0_27] : memref<1x3x16x16xf32, #tpu.memory_space<vmem>>, vector<1x1x16x16xf32>
    %19 = vector.shape_cast %18 : vector<1x1x16x16xf32> to vector<16x16xf32>
    %c0_28 = arith.constant 0 : index
    %c0_29 = arith.constant 0 : index
    %20 = vector.load %arg2[%c0_28, %c0_29] : memref<16x8xf32, #tpu.memory_space<vmem>>, vector<16x8xf32>
    %cst_30 = arith.constant dense<0.000000e+00> : vector<16x8xf32>
    %21 = tpu.matmul %19, %20, %cst_30 {dimension_numbers = #tpu.dot_dimension_numbers<[1], [0], [0], [1], [0, 0, 1, 1], [], []>} : vector<16x16xf32>, vector<16x8xf32>, vector<16x8xf32> -> vector<16x8xf32>
    %c0_31 = arith.constant 0 : index
    %c0_32 = arith.constant 0 : index
    %22 = vector.load %arg3[%c0_31, %c0_32] : memref<8x16xf32, #tpu.memory_space<vmem>>, vector<8x16xf32>
    %cst_33 = arith.constant dense<0.000000e+00> : vector<8x8xf32>
    %23 = tpu.matmul %22, %21, %cst_33 {dimension_numbers = #tpu.dot_dimension_numbers<[1], [0], [0], [1], [0, 0, 1, 1], [], []>} : vector<8x16xf32>, vector<16x8xf32>, vector<8x8xf32> -> vector<8x8xf32>
    %c0_34 = arith.constant 0 : index
    %c2_35 = arith.constant 2 : index
    %c0_36 = arith.constant 0 : index
    %c0_37 = arith.constant 0 : index
    %24 = vector.load %arg4[%c0_34, %c2_35, %c0_36, %c0_37] : memref<1x3x8x8xf32, #tpu.memory_space<vmem>>, vector<1x1x8x8xf32>
    %25 = vector.shape_cast %24 : vector<1x1x8x8xf32> to vector<8x8xf32>
    %26 = vector.shape_cast %23 : vector<8x8xf32> to vector<1x1x8x8xf32>
    tpu.vector_store %arg4[%c0_34, %c2_35, %c0_36, %c0_37], %26 {strides = array<i32>} : memref<1x3x8x8xf32, #tpu.memory_space<vmem>>, vector<1x1x8x8xf32>,
    return
  }
  func.func @transform_0(%arg0: i32) -> (i32, i32, i32, i32) {
    %c0_i32 = arith.constant 0 : i32
    %c0_i32_0 = arith.constant 0 : i32
    %c0_i32_1 = arith.constant 0 : i32
    %c0_i32_2 = arith.constant 0 : i32
    return %arg0, %c0_i32, %c0_i32_0, %c0_i32_1 : i32, i32, i32, i32
  }
  func.func @transform_1(%arg0: i32) -> (i32, i32) {
    %c0_i32 = arith.constant 0 : i32
    %c0_i32_0 = arith.constant 0 : i32
    %c0_i32_1 = arith.constant 0 : i32
    return %c0_i32, %c0_i32_0 : i32, i32
  }
  func.func @transform_2(%arg0: i32) -> (i32, i32) {
    %c0_i32 = arith.constant 0 : i32
    %c0_i32_0 = arith.constant 0 : i32
    %c0_i32_1 = arith.constant 0 : i32
    return %c0_i32, %c0_i32_0 : i32, i32
  }
  func.func @transform_3(%arg0: i32) -> (i32, i32, i32, i32) {
    %c0_i32 = arith.constant 0 : i32
    %c0_i32_0 = arith.constant 0 : i32
    %c0_i32_1 = arith.constant 0 : i32
    %c0_i32_2 = arith.constant 0 : i32
    return %arg0, %c0_i32, %c0_i32_0, %c0_i32_1 : i32, i32, i32, i32
  }
}

</mosaic_0001>

<llo_original>
// kernel: tpu_custom_call.1
$region0: #{tpu_custom_call.1}
  #allocation0 [shape = 'u32[]', space=smem, size = 0x4, offset = 0x4, fixed_abs, tag = 'smem constant byte address 0x4 - core index']
  #allocation1 [shape = 'u32[144,128]{1,0:T(1,128)}', space=vmem, size = 0x12000, scoped, tag = 'internal scratch']
  %s0 = inlined_call_operand.hbm [shape: f32[2,3,16,16], index: 0, kind: input, shape index: {}]
  %s1 = inlined_call_operand.vmem [shape: f32[16,8], index: 1, kind: input, shape index: {}]
  %s2 = inlined_call_operand.vmem [shape: f32[8,16], index: 2, kind: input, shape index: {}]
  %s3 = inlined_call_operand.hbm [shape: f32[2,3,8,8], index: 3, kind: output, shape index: {}]
  %s4 = sld [smem:[#allocation0]]
  $region49: #{tpu_custom_call.1} parent=0
    _
  %s6 = ssub.s32 1, %s4
  %s7 = scalar_select 0, %s6, %s4
  $region1: #{tpu_custom_call.1} parent=0
    #allocation2 [shape = 'u8[49152]{0}', space=vmem, size = 0xc000, scoped, tag = 'input window, operand 0']
    #allocation3 [shape = 's32[2]{0}', space=sflag, size = 0x8, scoped, tag = 'scoped memory for tpu_custom_call.1']
    #allocation4 [shape = 's32[2]{0}', space=sflag, size = 0x8, scoped, tag = 'scoped memory for tpu_custom_call.1']
    #allocation5 [shape = 'u8[24576]{0}', space=vmem, size = 0x6000, scoped, tag = 'output window, operand 0']
    %8 = vsyncpa [#allocation3], 0
    %s9 = scalar_lea.sflag [#allocation3], 1
    %10 = vsyncpa %s9, 0
    %11 = vsyncpa [#allocation4], 0
    %s12 = scalar_lea.sflag [#allocation4], 1
    %13 = vsyncpa %s12, 0
    loop: start=0, step=1, limit=4
    $region2: #{tpu_custom_call.1} parent=1 // loop_pre_header
      _
    $region3: #{tpu_custom_call.1} parent=1 // loop_header
      %s15 = sphi 0, %s19
      %p16 = scmp.ge.s32.totalorder %s15, 4
      %s25 = sphi 0, %s27
      %s28 = sphi 0, %s25
      %s29 = sphi 0, %s28
      %s45 = sphi 0, %s29
      %s49 = sphi 0, %s49
      %s51 = sphi 0, %s49
      %s52 = sphi 0, %s51
      %s66 = sphi 0, %s52
      %s70 = sphi 0, %s70
      %s72 = sphi 0, %s70
      %s73 = sphi 0, %s72
      %s87 = sphi 0, %s73
      %s93 = sphi 0, %s95
      %s96 = sphi 0, %s93
      %s97 = sphi 0, %s96
      %s113 = sphi 0, %s97
    $region4: #{tpu_custom_call.1} parent=1 // loop_header_branch
      %18 = sbr.rel (%p16) target = $region8
    $region5: #{tpu_custom_call.1} parent=1 // loop_body
      %s20 = ssub.s32 %s15, 1
      %s21 = ssub.s32 %s15, 2
      %s22 = sadd.s32 %s15, 1
      %s23 = ssub.s32 %s15, %s22
      %p24 = scmp.eq.s32.totalorder %s23, 0
      %s26 = sadd.s32 %s25, 1
      %s27 = scalar_select %p24, %s25, %s26
      %p30 = pneg %p24
      %p31 = scmp.eq.s32.totalorder %s15, 1
      %p32 = por %p30, %p31
      %p33 = scmp.ne.s32.totalorder %s25, %s28
      %p34 = scmp.eq.s32.totalorder %s15, 0
      %p35 = por %p33, %p34
      %p36 = scmp.ne.s32.totalorder %s25, %s28
      %p37 = scmp.eq.s32.totalorder %s20, 1
      %p38 = por %p36, %p37
      %p39 = scmp.ne.s32.totalorder %s28, %s29
      %p40 = scmp.eq.s32.totalorder %s20, 0
      %p41 = por %p39, %p40
      %p42 = scmp.ne.s32.totalorder %s28, %s29
      %p43 = scmp.eq.s32.totalorder %s21, 1
      %p44 = por %p42, %p43
      %p46 = scmp.ne.s32.totalorder %s29, %s45
      %p47 = scmp.eq.s32.totalorder %s21, 0
      %p48 = por %p46, %p47
      %s50 = sadd.s32 %s49, 1
      %p53 = scmp.eq.s32.totalorder %s15, 1
      %p54 = scmp.ne.s32.totalorder %s49, %s51
      %p55 = scmp.eq.s32.totalorder %s15, 0
      %p56 = por %p54, %p55
      %p57 = scmp.ne.s32.totalorder %s49, %s51
      %p58 = scmp.eq.s32.totalorder %s20, 1
      %p59 = por %p57, %p58
      %p60 = scmp.ne.s32.totalorder %s51, %s52
      %p61 = scmp.eq.s32.totalorder %s20, 0
      %p62 = por %p60, %p61
      %p63 = scmp.ne.s32.totalorder %s51, %s52
      %p64 = scmp.eq.s32.totalorder %s21, 1
      %p65 = por %p63, %p64
      %p67 = scmp.ne.s32.totalorder %s52, %s66
      %p68 = scmp.eq.s32.totalorder %s21, 0
      %p69 = por %p67, %p68
      %s71 = sadd.s32 %s70, 1
      %p74 = scmp.eq.s32.totalorder %s15, 1
      %p75 = scmp.ne.s32.totalorder %s70, %s72
      %p76 = scmp.eq.s32.totalorder %s15, 0
      %p77 = por %p75, %p76
      %p78 = scmp.ne.s32.totalorder %s70, %s72
      %p79 = scmp.eq.s32.totalorder %s20, 1
      %p80 = por %p78, %p79
      %p81 = scmp.ne.s32.totalorder %s72, %s73
      %p82 = scmp.eq.s32.totalorder %s20, 0
      %p83 = por %p81, %p82
      %p84 = scmp.ne.s32.totalorder %s72, %s73
      %p85 = scmp.eq.s32.totalorder %s21, 1
      %p86 = por %p84, %p85
      %p88 = scmp.ne.s32.totalorder %s73, %s87
      %p89 = scmp.eq.s32.totalorder %s21, 0
      %p90 = por %p88, %p89
      %s91 = ssub.s32 %s15, %s22
      %p92 = scmp.eq.s32.totalorder %s91, 0
      %s94 = sadd.s32 %s93, 1
      %s95 = scalar_select %p92, %s93, %s94
      %p98 = pneg %p92
      %p99 = scmp.eq.s32.totalorder %s15, 1
      %p100 = por %p98, %p99
      %p101 = scmp.ne.s32.totalorder %s93, %s96
      %p102 = scmp.eq.s32.totalorder %s15, 0
      %p103 = por %p101, %p102
      %p104 = scmp.ne.s32.totalorder %s93, %s96
      %p105 = scmp.eq.s32.totalorder %s20, 1
      %p106 = por %p104, %p105
      %p107 = scmp.ne.s32.totalorder %s96, %s97
      %p108 = scmp.eq.s32.totalorder %s20, 0
      %p109 = por %p107, %p108
      %p110 = scmp.ne.s32.totalorder %s96, %s97
      %p111 = scmp.eq.s32.totalorder %s21, 1
      %p112 = por %p110, %p111
      %p114 = scmp.ne.s32.totalorder %s97, %s113
      %p115 = scmp.eq.s32.totalorder %s21, 0
      %p116 = por %p114, %p115
      %p117 = scmp.le.s32.totalorder 1, %s15
      %p118 = scmp.lt.s32.totalorder %s15, 3
      %p119 = pnand %p117, %p118
      %p120 = pneg %p119
      // Predicated region
      $region9: #{tpu_custom_call.1} parent=5 // pred_check
        _
      $region10: #{tpu_custom_call.1} parent=5 // pred_check_branch
        %122 = sbr.rel (%p119) target = $region12
      $region11: #{tpu_custom_call.1} parent=5 // pred_region
        %s123 = ssub.s32 %s15, 1
        // Predicated region
        $region13: #{tpu_custom_call.1} parent=11 // pred_check
          %p124 = pneg %p62
        $region14: #{tpu_custom_call.1} parent=11 // pred_check_branch
          %126 = sbr.rel (%p124) target = $region16
        $region15: #{tpu_custom_call.1} parent=11 // pred_region
          _
        $region16: #{tpu_custom_call.1} parent=11 // pred_fallthru
          _
        // Predicated region
        $region17: #{tpu_custom_call.1} parent=11 // pred_check
          %p127 = pneg %p83
        $region18: #{tpu_custom_call.1} parent=11 // pred_check_branch
          %129 = sbr.rel (%p127) target = $region20
        $region19: #{tpu_custom_call.1} parent=11 // pred_region
          _
        $region20: #{tpu_custom_call.1} parent=11 // pred_fallthru
          _
      $region12: #{tpu_custom_call.1} parent=5 // pred_fallthru
        _
      %p130 = scmp.lt.s32.totalorder %s15, 2
      // Predicated region
      $region21: #{tpu_custom_call.1} parent=5 // pred_check
        %p131 = pneg %p130
      $region22: #{tpu_custom_call.1} parent=5 // pred_check_branch
        %133 = sbr.rel (%p131) target = $region24
      $region23: #{tpu_custom_call.1} parent=5 // pred_region
        // Predicated region
        $region25: #{tpu_custom_call.1} parent=23 // pred_check
          %p134 = pneg %p35
        $region26: #{tpu_custom_call.1} parent=23 // pred_check_branch
          %136 = sbr.rel (%p134) target = $region28
        $region27: #{tpu_custom_call.1} parent=23 // pred_region
          %s137 = sand.u32 %s25, 1
          %s138 = scalar_lea.sflag [#allocation3], %s137
          %s139 = sand.u32 %s25, 1
          %s140 = smul.addr %s139, 48
          %s141 = scalar_lea.vmem [#allocation2], %s140
          %s143 = ssub.s32 768, 768
          %144 = vsyncadd %s138, %s143
          %s145 = smul.addr %s15, 6
          %s146 = smul.addr %s145, 128
          %s147 = scalar_lea.hbm %s0, %s146
          %s148 = sshll.u32 %s141, 4
          %s149 = int_to_ptr.vmem [resolvable:$true] %s148
          %154 = dma.hbm_to_vmem [thread:$0]  %s147, 768, %s149, %s138, 128, 128, 8
        $region28: #{tpu_custom_call.1} parent=23 // pred_fallthru
          _
      $region24: #{tpu_custom_call.1} parent=5 // pred_fallthru
        _
      %p155 = scmp.le.s32.totalorder 1, %s15
      %p156 = scmp.lt.s32.totalorder %s15, 3
      %p157 = pnand %p155, %p156
      %p158 = pneg %p157
      // Predicated region
      $region29: #{tpu_custom_call.1} parent=5 // pred_check
        _
      $region30: #{tpu_custom_call.1} parent=5 // pred_check_branch
        %160 = sbr.rel (%p157) target = $region32
      $region31: #{tpu_custom_call.1} parent=5 // pred_region
        %s161 = ssub.s32 %s15, 1
        %s162 = sand.u32 %s28, 1
        %s163 = scalar_lea.sflag [#allocation3], %s162
        %s164 = sand.u32 %s28, 1
        %s165 = smul.addr %s164, 48
        %s166 = scalar_lea.vmem [#allocation2], %s165
        // Predicated region
        $region33: #{tpu_custom_call.1} parent=31 // pred_check
          %p167 = pneg %p41
        $region34: #{tpu_custom_call.1} parent=31 // pred_check_branch
          %169 = sbr.rel (%p167) target = $region36
        $region35: #{tpu_custom_call.1} parent=31 // pred_region
          %170 = dma.done %s163, 768
        $region36: #{tpu_custom_call.1} parent=31 // pred_fallthru
          _
        %s171 = sand.u32 %s28, 1
        %s172 = scalar_lea.sflag [#allocation3], %s171
        %s173 = sand.u32 %s28, 1
        %s174 = smul.addr %s173, 48
        %s175 = scalar_lea.vmem [#allocation2], %s174
        %p176 = pneg %p41
        %p177 = pneg %p38
        %p178 = pneg %p62
        %p179 = pneg %p59
        %p180 = pneg %p83
        %p181 = pneg %p80
        %p182 = pneg %p109
        %p183 = pneg %p106
        %s184 = sand.u32 %s96, 1
        %s185 = scalar_lea.sflag [#allocation4], %s184
        %s186 = sand.u32 %s96, 1
        %s187 = smul.addr %s186, 24
        %s188 = scalar_lea.vmem [#allocation5], %s187
        %v189 = vld [vmem:[%s166] sm:$0xff]
        %v190 = vld [vmem:[%s166 + $0x8] sm:$0xff]
        %v191 = vld [vmem:[%s1] sm:$0xff]
        %v192 = vld [vmem:[%s1 + $0x8] sm:$0xff]
        %vm193 = vcmask 130048
        %v195 = vsel %vm193, %v189, 0
        %v198 = vsel %vm193, %v190, 0
        %200 = vmatprep.subr.mxu0 0.0
        %201 = vmatpush1.msra.mxu0 %v191
        %202 = vmatprep.subr.mxu0 0.0
        %203 = vmatpush1.msra.mxu0 %v192
        %204 = vmatprep.subr.mxu0 0.0
        %205 = vmatpush1.msra.mxu0 0.0
        %206 = vmatprep.subr.mxu0 0.0
        %207 = vmatpush1.msra.mxu0 0.0
        %208 = vmatprep.subr.mxu0 0.0
        %209 = vmatpush1.msra.mxu0 0.0
        %210 = vmatprep.subr.mxu0 0.0
        %211 = vmatpush1.msra.mxu0 0.0
        %212 = vmatprep.subr.mxu0 0.0
        %213 = vmatpush1.msra.mxu0 0.0
        %214 = vmatprep.subr.mxu0 0.0
        %215 = vmatpush1.msra.mxu0 0.0
        %216 = vmatprep.subr.mxu0 0.0
        %217 = vmatpush1.msra.mxu0 0.0
        %218 = vmatprep.subr.mxu0 0.0
        %219 = vmatpush1.msra.mxu0 0.0
        %220 = vmatprep.subr.mxu0 0.0
        %221 = vmatpush1.msra.mxu0 0.0
        %222 = vmatprep.subr.mxu0 0.0
        %223 = vmatpush1.msra.mxu0 0.0
        %224 = vmatprep.subr.mxu0 0.0
        %225 = vmatpush1.msra.mxu0 0.0
        %226 = vmatprep.subr.mxu0 0.0
        %227 = vmatpush1.msra.mxu0 0.0
        %228 = vmatprep.subr.mxu0 0.0
        %229 = vmatpush1.msra.mxu0 0.0
        %230 = vmatprep.subr.mxu0 0.0
        %231 = vmatpush1.msra.mxu0 0.0
        %232 = vmatprep.subr.mxu0 0.0
        %233 = vmatpush1.msra.mxu0 0.0
        %234 = vmatprep.subr.mxu0 0.0
        %235 = vmatpush1.msra.mxu0 0.0
        %236 = vmatprep.subr.mxu0 0.0
        %237 = vmatpush1.msra.mxu0 0.0
        %238 = vmatprep.subr.mxu0 0.0
        %239 = vmatpush1.msra.mxu0 0.0
        %240 = vmatprep.subr.mxu0 0.0
        %241 = vmatpush1.msra.mxu0 0.0
        %242 = vmatprep.subr.mxu0 0.0
        %243 = vmatpush1.msra.mxu0 0.0
        %244 = vmatprep.subr.mxu0 0.0
        %245 = vmatpush1.msra.mxu0 0.0
        %246 = vmatprep.subr.mxu0 0.0
        %247 = vmatpush1.msra.mxu0 0.0
        %248 = vmatprep.subr.mxu0 0.0
        %249 = vmatpush1.msra.mxu0 0.0
        %250 = vmatprep.subr.mxu0 0.0
        %251 = vmatpush1.msra.mxu0 0.0
        %252 = vmatprep.subr.mxu0 0.0
        %253 = vmatpush1.msra.mxu0 0.0
        %254 = vmatprep.subr.mxu0 0.0
        %255 = vmatpush1.msra.mxu0 0.0
        %256 = vmatprep.subr.mxu0 0.0
        %257 = vmatpush1.msra.mxu0 0.0
        %258 = vmatprep.subr.mxu0 0.0
        %259 = vmatpush1.msra.mxu0 0.0
        %260 = vmatprep.subr.mxu0 0.0
        %261 = vmatpush1.msra.mxu0 0.0
        %262 = vmatprep.subr.mxu0 0.0
        %263 = vmatpush1.msra.mxu0 0.0
        %264 = vmatprep.mubr.f32.mxu0 0.0
        %265 = vmatmul.mubr.f32.gmra.mrb[0].mxu0 %v195
        %v266 = vpop.f32.mrb[0].mxu0
        %v267 = vadd.f32 0.0, %v266
        %v268 = vpop.f32.mrb[0].mxu0
        %269 = vmatprep.mubr.f32.mxu0 0.0
        %270 = vmatmul.mubr.f32.gmra.mrb[0].mxu0 %v198
        %v271 = vpop.f32.mrb[0].mxu0
        %v272 = vadd.f32 0.0, %v271
        %v273 = vpop.f32.mrb[0].mxu0
        %274 = vdwg.mxu0
        %v275 = vld [vmem:[%s2] sm:$0xff]
        %v277 = vsel %vm193, %v275, 0
        %279 = vmatprep.subr.mxu0 0.0
        %280 = vmatpush1.msra.mxu0 %v267
        %281 = vmatprep.subr.mxu0 0.0
        %282 = vmatpush1.msra.mxu0 %v272
        %283 = vmatprep.subr.mxu0 0.0
        %284 = vmatpush1.msra.mxu0 0.0
        %285 = vmatprep.subr.mxu0 0.0
        %286 = vmatpush1.msra.mxu0 0.0
        %287 = vmatprep.subr.mxu0 0.0
        %288 = vmatpush1.msra.mxu0 0.0
        %289 = vmatprep.subr.mxu0 0.0
        %290 = vmatpush1.msra.mxu0 0.0
        %291 = vmatprep.subr.mxu0 0.0
        %292 = vmatpush1.msra.mxu0 0.0
        %293 = vmatprep.subr.mxu0 0.0
        %294 = vmatpush1.msra.mxu0 0.0
        %295 = vmatprep.subr.mxu0 0.0
        %296 = vmatpush1.msra.mxu0 0.0
        %297 = vmatprep.subr.mxu0 0.0
        %298 = vmatpush1.msra.mxu0 0.0
        %299 = vmatprep.subr.mxu0 0.0
        %300 = vmatpush1.msra.mxu0 0.0
        %301 = vmatprep.subr.mxu0 0.0
        %302 = vmatpush1.msra.mxu0 0.0
        %303 = vmatprep.subr.mxu0 0.0
        %304 = vmatpush1.msra.mxu0 0.0
        %305 = vmatprep.subr.mxu0 0.0
        %306 = vmatpush1.msra.mxu0 0.0
        %307 = vmatprep.subr.mxu0 0.0
        %308 = vmatpush1.msra.mxu0 0.0
        %309 = vmatprep.subr.mxu0 0.0
        %310 = vmatpush1.msra.mxu0 0.0
        %311 = vmatprep.subr.mxu0 0.0
        %312 = vmatpush1.msra.mxu0 0.0
        %313 = vmatprep.subr.mxu0 0.0
        %314 = vmatpush1.msra.mxu0 0.0
        %315 = vmatprep.subr.mxu0 0.0
        %316 = vmatpush1.msra.mxu0 0.0
        %317 = vmatprep.subr.mxu0 0.0
        %318 = vmatpush1.msra.mxu0 0.0
        %319 = vmatprep.subr.mxu0 0.0
        %320 = vmatpush1.msra.mxu0 0.0
        %321 = vmatprep.subr.mxu0 0.0
        %322 = vmatpush1.msra.mxu0 0.0
        %323 = vmatprep.subr.mxu0 0.0
        %324 = vmatpush1.msra.mxu0 0.0
        %325 = vmatprep.subr.mxu0 0.0
        %326 = vmatpush1.msra.mxu0 0.0
        %327 = vmatprep.subr.mxu0 0.0
        %328 = vmatpush1.msra.mxu0 0.0
        %329 = vmatprep.subr.mxu0 0.0
        %330 = vmatpush1.msra.mxu0 0.0
        %331 = vmatprep.subr.mxu0 0.0
        %332 = vmatpush1.msra.mxu0 0.0
        %333 = vmatprep.subr.mxu0 0.0
        %334 = vmatpush1.msra.mxu0 0.0
        %335 = vmatprep.subr.mxu0 0.0
        %336 = vmatpush1.msra.mxu0 0.0
        %337 = vmatprep.subr.mxu0 0.0
        %338 = vmatpush1.msra.mxu0 0.0
        %339 = vmatprep.subr.mxu0 0.0
        %340 = vmatpush1.msra.mxu0 0.0
        %341 = vmatprep.subr.mxu0 0.0
        %342 = vmatpush1.msra.mxu0 0.0
        %343 = vmatprep.mubr.f32.mxu0 0.0
        %344 = vmatmul.mubr.f32.gmra.mrb[0].mxu0 %v277
        %v345 = vpop.f32.mrb[0].mxu0
        %v346 = vadd.f32 0.0, %v345
        %v347 = vpop.f32.mrb[0].mxu0
        %348 = vdwg.mxu0
        %vm349 = vcmask 64512
        %350 = vst.msk [vmem:[%s188] sm:$0xff] %vm349, %v346
        %s351 = scalar_lea.vmem %s166, 16 [#allocation2]
        %v352 = vld [vmem:[%s351] sm:$0xff]
        %v353 = vld [vmem:[%s351 + $0x8] sm:$0xff]
        %v354 = vld [vmem:[%s1] sm:$0xff]
        %v355 = vld [vmem:[%s1 + $0x8] sm:$0xff]
        %v357 = vsel %vm193, %v352, 0
        %v360 = vsel %vm193, %v353, 0
        %362 = vmatprep.subr.mxu0 0.0
        %363 = vmatpush1.msra.mxu0 %v354
        %364 = vmatprep.subr.mxu0 0.0
        %365 = vmatpush1.msra.mxu0 %v355
        %366 = vmatprep.subr.mxu0 0.0
        %367 = vmatpush1.msra.mxu0 0.0
        %368 = vmatprep.subr.mxu0 0.0
        %369 = vmatpush1.msra.mxu0 0.0
        %370 = vmatprep.subr.mxu0 0.0
        %371 = vmatpush1.msra.mxu0 0.0
        %372 = vmatprep.subr.mxu0 0.0
        %373 = vmatpush1.msra.mxu0 0.0
        %374 = vmatprep.subr.mxu0 0.0
        %375 = vmatpush1.msra.mxu0 0.0
        %376 = vmatprep.subr.mxu0 0.0
        %377 = vmatpush1.msra.mxu0 0.0
        %378 = vmatprep.subr.mxu0 0.0
        %379 = vmatpush1.msra.mxu0 0.0
        %380 = vmatprep.subr.mxu0 0.0
        %381 = vmatpush1.msra.mxu0 0.0
        %382 = vmatprep.subr.mxu0 0.0
        %383 = vmatpush1.msra.mxu0 0.0
        %384 = vmatprep.subr.mxu0 0.0
        %385 = vmatpush1.msra.mxu0 0.0
        %386 = vmatprep.subr.mxu0 0.0
        %387 = vmatpush1.msra.mxu0 0.0
        %388 = vmatprep.subr.mxu0 0.0
        %389 = vmatpush1.msra.mxu0 0.0
        %390 = vmatprep.subr.mxu0 0.0
        %391 = vmatpush1.msra.mxu0 0.0
        %392 = vmatprep.subr.mxu0 0.0
        %393 = vmatpush1.msra.mxu0 0.0
        %394 = vmatprep.subr.mxu0 0.0
        %395 = vmatpush1.msra.mxu0 0.0
        %396 = vmatprep.subr.mxu0 0.0
        %397 = vmatpush1.msra.mxu0 0.0
        %398 = vmatprep.subr.mxu0 0.0
        %399 = vmatpush1.msra.mxu0 0.0
        %400 = vmatprep.subr.mxu0 0.0
        %401 = vmatpush1.msra.mxu0 0.0
        %402 = vmatprep.subr.mxu0 0.0
        %403 = vmatpush1.msra.mxu0 0.0
        %404 = vmatprep.subr.mxu0 0.0
        %405 = vmatpush1.msra.mxu0 0.0
        %406 = vmatprep.subr.mxu0 0.0
        %407 = vmatpush1.msra.mxu0 0.0
        %408 = vmatprep.subr.mxu0 0.0
        %409 = vmatpush1.msra.mxu0 0.0
        %410 = vmatprep.subr.mxu0 0.0
        %411 = vmatpush1.msra.mxu0 0.0
        %412 = vmatprep.subr.mxu0 0.0
        %413 = vmatpush1.msra.mxu0 0.0
        %414 = vmatprep.subr.mxu0 0.0
        %415 = vmatpush1.msra.mxu0 0.0
        %416 = vmatprep.subr.mxu0 0.0
        %417 = vmatpush1.msra.mxu0 0.0
        %418 = vmatprep.subr.mxu0 0.0
        %419 = vmatpush1.msra.mxu0 0.0
        %420 = vmatprep.subr.mxu0 0.0
        %421 = vmatpush1.msra.mxu0 0.0
        %422 = vmatprep.subr.mxu0 0.0
        %423 = vmatpush1.msra.mxu0 0.0
        %424 = vmatprep.subr.mxu0 0.0
        %425 = vmatpush1.msra.mxu0 0.0
        %426 = vmatprep.mubr.f32.mxu0 0.0
        %427 = vmatmul.mubr.f32.gmra.mrb[0].mxu0 %v357
        %v428 = vpop.f32.mrb[0].mxu0
        %v429 = vadd.f32 0.0, %v428
        %v430 = vpop.f32.mrb[0].mxu0
        %431 = vmatprep.mubr.f32.mxu0 0.0
        %432 = vmatmul.mubr.f32.gmra.mrb[0].mxu0 %v360
        %v433 = vpop.f32.mrb[0].mxu0
        %v434 = vadd.f32 0.0, %v433
        %v435 = vpop.f32.mrb[0].mxu0
        %436 = vdwg.mxu0
        %v437 = vld [vmem:[%s2] sm:$0xff]
        %v439 = vsel %vm193, %v437, 0
        %441 = vmatprep.subr.mxu0 0.0
        %442 = vmatpush1.msra.mxu0 %v429
        %443 = vmatprep.subr.mxu0 0.0
        %444 = vmatpush1.msra.mxu0 %v434
        %445 = vmatprep.subr.mxu0 0.0
        %446 = vmatpush1.msra.mxu0 0.0
        %447 = vmatprep.subr.mxu0 0.0
        %448 = vmatpush1.msra.mxu0 0.0
        %449 = vmatprep.subr.mxu0 0.0
        %450 = vmatpush1.msra.mxu0 0.0
        %451 = vmatprep.subr.mxu0 0.0
        %452 = vmatpush1.msra.mxu0 0.0
        %453 = vmatprep.subr.mxu0 0.0
        %454 = vmatpush1.msra.mxu0 0.0
        %455 = vmatprep.subr.mxu0 0.0
        %456 = vmatpush1.msra.mxu0 0.0
        %457 = vmatprep.subr.mxu0 0.0
        %458 = vmatpush1.msra.mxu0 0.0
        %459 = vmatprep.subr.mxu0 0.0
        %460 = vmatpush1.msra.mxu0 0.0
        %461 = vmatprep.subr.mxu0 0.0
        %462 = vmatpush1.msra.mxu0 0.0
        %463 = vmatprep.subr.mxu0 0.0
        %464 = vmatpush1.msra.mxu0 0.0
        %465 = vmatprep.subr.mxu0 0.0
        %466 = vmatpush1.msra.mxu0 0.0
        %467 = vmatprep.subr.mxu0 0.0
        %468 = vmatpush1.msra.mxu0 0.0
        %469 = vmatprep.subr.mxu0 0.0
        %470 = vmatpush1.msra.mxu0 0.0
        %471 = vmatprep.subr.mxu0 0.0
        %472 = vmatpush1.msra.mxu0 0.0
        %473 = vmatprep.subr.mxu0 0.0
        %474 = vmatpush1.msra.mxu0 0.0
        %475 = vmatprep.subr.mxu0 0.0
        %476 = vmatpush1.msra.mxu0 0.0
        %477 = vmatprep.subr.mxu0 0.0
        %478 = vmatpush1.msra.mxu0 0.0
        %479 = vmatprep.subr.mxu0 0.0
        %480 = vmatpush1.msra.mxu0 0.0
        %481 = vmatprep.subr.mxu0 0.0
        %482 = vmatpush1.msra.mxu0 0.0
        %483 = vmatprep.subr.mxu0 0.0
        %484 = vmatpush1.msra.mxu0 0.0
        %485 = vmatprep.subr.mxu0 0.0
        %486 = vmatpush1.msra.mxu0 0.0
        %487 = vmatprep.subr.mxu0 0.0
        %488 = vmatpush1.msra.mxu0 0.0
        %489 = vmatprep.subr.mxu0 0.0
        %490 = vmatpush1.msra.mxu0 0.0
        %491 = vmatprep.subr.mxu0 0.0
        %492 = vmatpush1.msra.mxu0 0.0
        %493 = vmatprep.subr.mxu0 0.0
        %494 = vmatpush1.msra.mxu0 0.0
        %495 = vmatprep.subr.mxu0 0.0
        %496 = vmatpush1.msra.mxu0 0.0
        %497 = vmatprep.subr.mxu0 0.0
        %498 = vmatpush1.msra.mxu0 0.0
        %499 = vmatprep.subr.mxu0 0.0
        %500 = vmatpush1.msra.mxu0 0.0
        %501 = vmatprep.subr.mxu0 0.0
        %502 = vmatpush1.msra.mxu0 0.0
        %503 = vmatprep.subr.mxu0 0.0
        %504 = vmatpush1.msra.mxu0 0.0
        %505 = vmatprep.mubr.f32.mxu0 0.0
        %506 = vmatmul.mubr.f32.gmra.mrb[0].mxu0 %v439
        %v507 = vpop.f32.mrb[0].mxu0
        %v508 = vadd.f32 0.0, %v507
        %v509 = vpop.f32.mrb[0].mxu0
        %510 = vdwg.mxu0
        %s511 = scalar_lea.vmem %s188, 8 [#allocation5]
        %512 = vst.msk [vmem:[%s511] sm:$0xff] %vm349, %v508
        %s513 = scalar_lea.vmem %s166, 32 [#allocation2]
        %v514 = vld [vmem:[%s513] sm:$0xff]
        %v515 = vld [vmem:[%s513 + $0x8] sm:$0xff]
        %v516 = vld [vmem:[%s1] sm:$0xff]
        %v517 = vld [vmem:[%s1 + $0x8] sm:$0xff]
        %v519 = vsel %vm193, %v514, 0
        %v522 = vsel %vm193, %v515, 0
        %524 = vmatprep.subr.mxu0 0.0
        %525 = vmatpush1.msra.mxu0 %v516
        %526 = vmatprep.subr.mxu0 0.0
        %527 = vmatpush1.msra.mxu0 %v517
        %528 = vmatprep.subr.mxu0 0.0
        %529 = vmatpush1.msra.mxu0 0.0
        %530 = vmatprep.subr.mxu0 0.0
        %531 = vmatpush1.msra.mxu0 0.0
        %532 = vmatprep.subr.mxu0 0.0
        %533 = vmatpush1.msra.mxu0 0.0
        %534 = vmatprep.subr.mxu0 0.0
        %535 = vmatpush1.msra.mxu0 0.0
        %536 = vmatprep.subr.mxu0 0.0
        %537 = vmatpush1.msra.mxu0 0.0
        %538 = vmatprep.subr.mxu0 0.0
        %539 = vmatpush1.msra.mxu0 0.0
        %540 = vmatprep.subr.mxu0 0.0
        %541 = vmatpush1.msra.mxu0 0.0
        %542 = vmatprep.subr.mxu0 0.0
        %543 = vmatpush1.msra.mxu0 0.0
        %544 = vmatprep.subr.mxu0 0.0
        %545 = vmatpush1.msra.mxu0 0.0
        %546 = vmatprep.subr.mxu0 0.0
        %547 = vmatpush1.msra.mxu0 0.0
        %548 = vmatprep.subr.mxu0 0.0
        %549 = vmatpush1.msra.mxu0 0.0
        %550 = vmatprep.subr.mxu0 0.0
        %551 = vmatpush1.msra.mxu0 0.0
        %552 = vmatprep.subr.mxu0 0.0
        %553 = vmatpush1.msra.mxu0 0.0
        %554 = vmatprep.subr.mxu0 0.0
        %555 = vmatpush1.msra.mxu0 0.0
        %556 = vmatprep.subr.mxu0 0.0
        %557 = vmatpush1.msra.mxu0 0.0
        %558 = vmatprep.subr.mxu0 0.0
        %559 = vmatpush1.msra.mxu0 0.0
        %560 = vmatprep.subr.mxu0 0.0
        %561 = vmatpush1.msra.mxu0 0.0
        %562 = vmatprep.subr.mxu0 0.0
        %563 = vmatpush1.msra.mxu0 0.0
        %564 = vmatprep.subr.mxu0 0.0
        %565 = vmatpush1.msra.mxu0 0.0
        %566 = vmatprep.subr.mxu0 0.0
        %567 = vmatpush1.msra.mxu0 0.0
        %568 = vmatprep.subr.mxu0 0.0
        %569 = vmatpush1.msra.mxu0 0.0
        %570 = vmatprep.subr.mxu0 0.0
        %571 = vmatpush1.msra.mxu0 0.0
        %572 = vmatprep.subr.mxu0 0.0
        %573 = vmatpush1.msra.mxu0 0.0
        %574 = vmatprep.subr.mxu0 0.0
        %575 = vmatpush1.msra.mxu0 0.0
        %576 = vmatprep.subr.mxu0 0.0
        %577 = vmatpush1.msra.mxu0 0.0
        %578 = vmatprep.subr.mxu0 0.0
        %579 = vmatpush1.msra.mxu0 0.0
        %580 = vmatprep.subr.mxu0 0.0
        %581 = vmatpush1.msra.mxu0 0.0
        %582 = vmatprep.subr.mxu0 0.0
        %583 = vmatpush1.msra.mxu0 0.0
        %584 = vmatprep.subr.mxu0 0.0
        %585 = vmatpush1.msra.mxu0 0.0
        %586 = vmatprep.subr.mxu0 0.0
        %587 = vmatpush1.msra.mxu0 0.0
        %588 = vmatprep.mubr.f32.mxu0 0.0
        %589 = vmatmul.mubr.f32.gmra.mrb[0].mxu0 %v519
        %v590 = vpop.f32.mrb[0].mxu0
        %v591 = vadd.f32 0.0, %v590
        %v592 = vpop.f32.mrb[0].mxu0
        %593 = vmatprep.mubr.f32.mxu0 0.0
        %594 = vmatmul.mubr.f32.gmra.mrb[0].mxu0 %v522
        %v595 = vpop.f32.mrb[0].mxu0
        %v596 = vadd.f32 0.0, %v595
        %v597 = vpop.f32.mrb[0].mxu0
        %598 = vdwg.mxu0
        %v599 = vld [vmem:[%s2] sm:$0xff]
        %v601 = vsel %vm193, %v599, 0
        %603 = vmatprep.subr.mxu0 0.0
        %604 = vmatpush1.msra.mxu0 %v591
        %605 = vmatprep.subr.mxu0 0.0
        %606 = vmatpush1.msra.mxu0 %v596
        %607 = vmatprep.subr.mxu0 0.0
        %608 = vmatpush1.msra.mxu0 0.0
        %609 = vmatprep.subr.mxu0 0.0
        %610 = vmatpush1.msra.mxu0 0.0
        %611 = vmatprep.subr.mxu0 0.0
        %612 = vmatpush1.msra.mxu0 0.0
        %613 = vmatprep.subr.mxu0 0.0
        %614 = vmatpush1.msra.mxu0 0.0
        %615 = vmatprep.subr.mxu0 0.0
        %616 = vmatpush1.msra.mxu0 0.0
        %617 = vmatprep.subr.mxu0 0.0
        %618 = vmatpush1.msra.mxu0 0.0
        %619 = vmatprep.subr.mxu0 0.0
        %620 = vmatpush1.msra.mxu0 0.0
        %621 = vmatprep.subr.mxu0 0.0
        %622 = vmatpush1.msra.mxu0 0.0
        %623 = vmatprep.subr.mxu0 0.0
        %624 = vmatpush1.msra.mxu0 0.0
        %625 = vmatprep.subr.mxu0 0.0
        %626 = vmatpush1.msra.mxu0 0.0
        %627 = vmatprep.subr.mxu0 0.0
        %628 = vmatpush1.msra.mxu0 0.0
        %629 = vmatprep.subr.mxu0 0.0
        %630 = vmatpush1.msra.mxu0 0.0
        %631 = vmatprep.subr.mxu0 0.0
        %632 = vmatpush1.msra.mxu0 0.0
        %633 = vmatprep.subr.mxu0 0.0
        %634 = vmatpush1.msra.mxu0 0.0
        %635 = vmatprep.subr.mxu0 0.0
        %636 = vmatpush1.msra.mxu0 0.0
        %637 = vmatprep.subr.mxu0 0.0
        %638 = vmatpush1.msra.mxu0 0.0
        %639 = vmatprep.subr.mxu0 0.0
        %640 = vmatpush1.msra.mxu0 0.0
        %641 = vmatprep.subr.mxu0 0.0
        %642 = vmatpush1.msra.mxu0 0.0
        %643 = vmatprep.subr.mxu0 0.0
        %644 = vmatpush1.msra.mxu0 0.0
        %645 = vmatprep.subr.mxu0 0.0
        %646 = vmatpush1.msra.mxu0 0.0
        %647 = vmatprep.subr.mxu0 0.0
        %648 = vmatpush1.msra.mxu0 0.0
        %649 = vmatprep.subr.mxu0 0.0
        %650 = vmatpush1.msra.mxu0 0.0
        %651 = vmatprep.subr.mxu0 0.0
        %652 = vmatpush1.msra.mxu0 0.0
        %653 = vmatprep.subr.mxu0 0.0
        %654 = vmatpush1.msra.mxu0 0.0
        %655 = vmatprep.subr.mxu0 0.0
        %656 = vmatpush1.msra.mxu0 0.0
        %657 = vmatprep.subr.mxu0 0.0
        %658 = vmatpush1.msra.mxu0 0.0
        %659 = vmatprep.subr.mxu0 0.0
        %660 = vmatpush1.msra.mxu0 0.0
        %661 = vmatprep.subr.mxu0 0.0
        %662 = vmatpush1.msra.mxu0 0.0
        %663 = vmatprep.subr.mxu0 0.0
        %664 = vmatpush1.msra.mxu0 0.0
        %665 = vmatprep.subr.mxu0 0.0
        %666 = vmatpush1.msra.mxu0 0.0
        %667 = vmatprep.mubr.f32.mxu0 0.0
        %668 = vmatmul.mubr.f32.gmra.mrb[0].mxu0 %v601
        %v669 = vpop.f32.mrb[0].mxu0
        %v670 = vadd.f32 0.0, %v669
        %v671 = vpop.f32.mrb[0].mxu0
        %672 = vdwg.mxu0
        %s673 = scalar_lea.vmem %s188, 16 [#allocation5]
        %674 = vst.msk [vmem:[%s673] sm:$0xff] %vm349, %v670
        %s675 = sand.u32 %s96, 1
        %s676 = scalar_lea.sflag [#allocation4], %s675
        %s677 = sand.u32 %s96, 1
        %s678 = smul.addr %s677, 24
        %s679 = scalar_lea.vmem [#allocation5], %s678
        // Predicated region
        $region37: #{tpu_custom_call.1} parent=31 // pred_check
          %p680 = pneg %p106
        $region38: #{tpu_custom_call.1} parent=31 // pred_check_branch
          %682 = sbr.rel (%p680) target = $region40
        $region39: #{tpu_custom_call.1} parent=31 // pred_region
          %s684 = ssub.s32 384, 384
          %685 = vsyncadd %s676, %s684
          %s686 = smul.addr %s20, 3
          %s687 = smul.addr %s686, 128
          %s688 = scalar_lea.hbm %s3, %s687
          %s689 = sshll.u32 %s679, 4
          %s690 = int_to_ptr.vmem [resolvable:$true] %s689
          %695 = dma.vmem_to_hbm [thread:$0]  %s690, 384, %s688, %s676, 128, 128, 8
        $region40: #{tpu_custom_call.1} parent=31 // pred_fallthru
          _
      $region32: #{tpu_custom_call.1} parent=5 // pred_fallthru
        _
      %p696 = scmp.le.s32.totalorder 2, %s15
      // Predicated region
      $region41: #{tpu_custom_call.1} parent=5 // pred_check
        %p697 = pneg %p696
      $region42: #{tpu_custom_call.1} parent=5 // pred_check_branch
        %699 = sbr.rel (%p697) target = $region44
      $region43: #{tpu_custom_call.1} parent=5 // pred_region
        %s700 = ssub.s32 %s15, 2
        // Predicated region
        $region45: #{tpu_custom_call.1} parent=43 // pred_check
          %p701 = pneg %p112
        $region46: #{tpu_custom_call.1} parent=43 // pred_check_branch
          %703 = sbr.rel (%p701) target = $region48
        $region47: #{tpu_custom_call.1} parent=43 // pred_region
          %s704 = sand.u32 %s97, 1
          %s705 = scalar_lea.sflag [#allocation4], %s704
          %s706 = sand.u32 %s97, 1
          %s707 = smul.addr %s706, 24
          %s708 = scalar_lea.vmem [#allocation5], %s707
          %709 = dma.done %s705, 384
        $region48: #{tpu_custom_call.1} parent=43 // pred_fallthru
          _
      $region44: #{tpu_custom_call.1} parent=5 // pred_fallthru
        _
    $region6: #{tpu_custom_call.1} parent=1 // loop_footer
      %s19 = sadd.s32 1, %s15
    $region7: #{tpu_custom_call.1} parent=1 // loop_footer_branch
      %14 = sbr.rel target = $region3
    $region8: #{tpu_custom_call.1} parent=1 // loop_exit
      _
    %710 = vsyncpa [#allocation3], 1
    %s711 = scalar_lea.sflag [#allocation3], 1
    %712 = vsyncpa %s711, 1
    %713 = vsyncpa [#allocation4], 1
    %s714 = scalar_lea.sflag [#allocation4], 1
    %715 = vsyncpa %s714, 1

</llo_original>
